<compile_context>
chip_gen: v7x
topology: tpu7x:2x2x1
jax: 0.10.0
libtpu: 0.0.40
codegen_flags: <defaults>
</compile_context>

<pallas_src>
import functools

import jax
import jax.numpy as jnp
from jax.experimental import pallas as pl
from jax.experimental.pallas import tpu as pltpu


def _round_up(v, m):
    return (v + m - 1) // m * m


# ---------------------------------------------------------------------------
# Fused MLP kernel: x -> Linear+Tanh -> [ (Resid)Linear+Tanh ]*(L-2) -> Linear
# refs = (x_ref, w0, b0, w1, b1, ..., wL-1, bL-1, o_ref); all full VMEM blocks.
# `resid_flags` is a static per-layer tuple; the layer loop is unrolled at
# trace time and intermediates stay in vregs/VMEM.
# ---------------------------------------------------------------------------
def _mlp_kernel(resid_flags, x_ref, *refs):
    o_ref = refs[-1]
    wb = refs[:-1]
    num_layers = len(wb) // 2

    h = x_ref[...]
    for i in range(num_layers):
        w = wb[2 * i][...]
        b = wb[2 * i + 1][...]
        y = jnp.dot(h, w, preferred_element_type=jnp.float32) + b
        if i < num_layers - 1:           # hidden layers: (optional resid) + tanh
            if resid_flags[i]:
                y = y + h                # ResidLinear: act(linear(x) + x)
            h = jnp.tanh(y)
        else:                            # final projection: no activation
            h = y
    o_ref[...] = h.astype(o_ref.dtype)


# ---------------------------------------------------------------------------
# Wrapper: pad to TPU-friendly shapes, run one fused pallas_call, slice back.
#   images: [B, C, H, W] (NCHW)
#   params: list of (w [n_in, n_out], b [n_out]) — w is PyTorch weight.T
#   resid : matches Encoder(resid=...); only hidden->hidden layers get the
#           residual add (the first and last layers never do).
# ---------------------------------------------------------------------------
@functools.partial(jax.jit, static_argnames=("resid",))
def encoder_forward(images, params, resid=False):
    B = images.shape[0]
    x = images.reshape(B, -1)
    n_in = x.shape[1]
    num_layers = len(params)
    latent_dim = params[-1][0].shape[1]

    # --- batch padding / tiling (sublane multiple of 8, tile 128 for big B) ---
    TB = 128 if B >= 128 else _round_up(B, 8)
    B_pad = _round_up(B, TB)
    if B_pad != B:
        x = jnp.pad(x, ((0, B_pad - B), (0, 0)))

    # --- lane-dense feature padding (zeros preserve the math exactly) ---
    n_in_pad = _round_up(n_in, 128)
    if n_in_pad != n_in:
        x = jnp.pad(x, ((0, 0), (0, n_in_pad - n_in)))

    padded_wb = []
    prev = n_in_pad
    for (w, b) in params:
        ni, no = w.shape
        no_pad = _round_up(no, 128)
        wp = jnp.zeros((prev, no_pad), w.dtype).at[:ni, :no].set(w)
        bp = jnp.zeros((1, no_pad), b.dtype).at[0, :no].set(b)
        padded_wb.append((wp, bp))
        prev = no_pad
    out_pad = prev

    # Per-layer residual flags (static): only layers 1 .. num_layers-2.
    resid_flags = tuple(
        bool(resid) and (0 < i < num_layers - 1) for i in range(num_layers)
    )

    # --- specs: batch-tiled x/out, fully-resident weights/biases ---
    in_specs = [pl.BlockSpec((TB, n_in_pad), lambda i: (i, 0))]
    flat_args = []
    for (wp, bp) in padded_wb:
        flat_args.extend([wp, bp])
        in_specs.append(pl.BlockSpec(wp.shape, lambda i: (0, 0)))
        in_specs.append(pl.BlockSpec(bp.shape, lambda i: (0, 0)))
    out_specs = pl.BlockSpec((TB, out_pad), lambda i: (i, 0))

    y = pl.pallas_call(
        functools.partial(_mlp_kernel, resid_flags),
        out_shape=jax.ShapeDtypeStruct((B_pad, out_pad), x.dtype),
        grid=(B_pad // TB,),
        in_specs=in_specs,
        out_specs=out_specs,
        compiler_params=pltpu.CompilerParams(
            dimension_semantics=("parallel",)  # shard batch tiles across TCs (v7x)
        ),
    )(x, *flat_args)

    return y[:B, :latent_dim]


# ---------------------------------------------------------------------------
# Parameter init (PyTorch nn.Linear default: U(-1/sqrt(fan_in), +1/sqrt(fan_in)))
# Weights stored as [n_in, n_out] (transpose of PyTorch) so y = x @ W + b.
# ---------------------------------------------------------------------------
def init_linear(key, n_in, n_out, dtype=jnp.float32):
    kw, kb = jax.random.split(key)
    bound = 1.0 / jnp.sqrt(jnp.float32(n_in))
    w = jax.random.uniform(kw, (n_in, n_out), dtype, -bound, bound)
    b = jax.random.uniform(kb, (n_out,), dtype, -bound, bound)
    return w, b


def init_encoder_params(key, n, latent_dim, hidden_dim, num_layers):
    params = []
    keys = jax.random.split(key, num_layers + 1)
    params.append(init_linear(keys[0], n, hidden_dim))                    # n -> hidden
    for i in range(1, num_layers):                                        # hidden -> hidden
        params.append(init_linear(keys[i], hidden_dim, hidden_dim))
    params.append(init_linear(keys[num_layers], hidden_dim, latent_dim))  # hidden -> latent
    return params


# Pure-JAX reference (mirrors the PyTorch Encoder forward) for correctness.
def encoder_reference(images, params, resid=False):
    B = images.shape[0]
    x = images.reshape(B, -1)
    num = len(params)
    for i, (w, b) in enumerate(params):
        y = x @ w + b
        if i < num - 1:
            if resid and (0 < i < num - 1):
                y = y + x
            x = jnp.tanh(y)
        else:
            x = y
    return x


if __name__ == "__main__":
    # Small, module-consistent shapes.
    B, C, H, W = 2, 4, 16, 16
    n = C * H * W          # 1024
    hidden_dim = 32
    num_layers = 3
    latent_dim = 8

    key = jax.random.PRNGKey(0)
    k_img, k_params = jax.random.split(key)

    images = jax.random.normal(k_img, (B, C, H, W), jnp.float32)
    params = init_encoder_params(k_params, n, latent_dim, hidden_dim, num_layers)

    ok = True
    for resid in (False, True):
        z = encoder_forward(images, params, resid=resid)
        z = jax.block_until_ready(z)
        z_ref = encoder_reference(images, params, resid=resid)
        ok &= z.shape == (B, latent_dim)
        ok &= bool(jnp.allclose(z, z_ref, atol=1e-5, rtol=1e-5))

    assert ok, "mismatch vs reference"
    print("KERNEL_OK")
</pallas_src>

<mosaic_0001>
module attributes {stable_mosaic.version = 11 : i64} {
  func.func @_mlp_kernel(%arg0: i32, %arg1: memref<8x1024xf32, #tpu.memory_space<vmem>>, %arg2: memref<1024x128xf32, #tpu.memory_space<vmem>>, %arg3: memref<1x128xf32, #tpu.memory_space<vmem>>, %arg4: memref<128x128xf32, #tpu.memory_space<vmem>>, %arg5: memref<1x128xf32, #tpu.memory_space<vmem>>, %arg6: memref<128x128xf32, #tpu.memory_space<vmem>>, %arg7: memref<1x128xf32, #tpu.memory_space<vmem>>, %arg8: memref<128x128xf32, #tpu.memory_space<vmem>>, %arg9: memref<1x128xf32, #tpu.memory_space<vmem>>, %arg10: memref<8x128xf32, #tpu.memory_space<vmem>>) attributes {dimension_semantics = [#tpu.dimension_semantics<parallel>], iteration_bounds = array<i64: 1>, scalar_prefetch = 0 : i64, scratch_operands = 0 : i64, tpu.core_type = #tpu.core_type<tc>, window_params = [{transform_indices = @transform_0, window_bounds = array<i64: 8, 1024>}, {pipeline_mode = #tpu.pipeline_mode<synchronous>, transform_indices = @transform_1, window_bounds = array<i64: 1024, 128>}, {pipeline_mode = #tpu.pipeline_mode<synchronous>, transform_indices = @transform_2, window_bounds = array<i64: 1, 128>}, {pipeline_mode = #tpu.pipeline_mode<synchronous>, transform_indices = @transform_3, window_bounds = array<i64: 128, 128>}, {pipeline_mode = #tpu.pipeline_mode<synchronous>, transform_indices = @transform_4, window_bounds = array<i64: 1, 128>}, {pipeline_mode = #tpu.pipeline_mode<synchronous>, transform_indices = @transform_5, window_bounds = array<i64: 128, 128>}, {pipeline_mode = #tpu.pipeline_mode<synchronous>, transform_indices = @transform_6, window_bounds = array<i64: 1, 128>}, {pipeline_mode = #tpu.pipeline_mode<synchronous>, transform_indices = @transform_7, window_bounds = array<i64: 128, 128>}, {pipeline_mode = #tpu.pipeline_mode<synchronous>, transform_indices = @transform_8, window_bounds = array<i64: 1, 128>}, {transform_indices = @transform_9, window_bounds = array<i64: 8, 128>}]} {
    %c0 = arith.constant 0 : index
    %c0_0 = arith.constant 0 : index
    %0 = vector.load %arg1[%c0, %c0_0] : memref<8x1024xf32, #tpu.memory_space<vmem>>, vector<8x1024xf32>
    %c0_1 = arith.constant 0 : index
    %c0_2 = arith.constant 0 : index
    %1 = vector.load %arg2[%c0_1, %c0_2] : memref<1024x128xf32, #tpu.memory_space<vmem>>, vector<1024x128xf32>
    %c0_3 = arith.constant 0 : index
    %c0_4 = arith.constant 0 : index
    %2 = vector.load %arg3[%c0_3, %c0_4] : memref<1x128xf32, #tpu.memory_space<vmem>>, vector<1x128xf32>
    %cst = arith.constant dense<0.000000e+00> : vector<8x128xf32>
    %3 = tpu.matmul %0, %1, %cst {dimension_numbers = #tpu.dot_dimension_numbers<[1], [0], [0], [1], [0, 0, 1, 1], [], []>} : vector<8x1024xf32>, vector<1024x128xf32>, vector<8x128xf32> -> vector<8x128xf32>
    %4 = vector.broadcast %2 : vector<1x128xf32> to vector<8x128xf32>
    %5 = arith.addf %3, %4 : vector<8x128xf32>
    %6 = math.tanh %5 : vector<8x128xf32>
    %c0_5 = arith.constant 0 : index
    %c0_6 = arith.constant 0 : index
    %7 = vector.load %arg4[%c0_5, %c0_6] : memref<128x128xf32, #tpu.memory_space<vmem>>, vector<128x128xf32>
    %c0_7 = arith.constant 0 : index
    %c0_8 = arith.constant 0 : index
    %8 = vector.load %arg5[%c0_7, %c0_8] : memref<1x128xf32, #tpu.memory_space<vmem>>, vector<1x128xf32>
    %cst_9 = arith.constant dense<0.000000e+00> : vector<8x128xf32>
    %9 = tpu.matmul %6, %7, %cst_9 {dimension_numbers = #tpu.dot_dimension_numbers<[1], [0], [0], [1], [0, 0, 1, 1], [], []>} : vector<8x128xf32>, vector<128x128xf32>, vector<8x128xf32> -> vector<8x128xf32>
    %10 = vector.broadcast %8 : vector<1x128xf32> to vector<8x128xf32>
    %11 = arith.addf %9, %10 : vector<8x128xf32>
    %12 = math.tanh %11 : vector<8x128xf32>
    %c0_10 = arith.constant 0 : index
    %c0_11 = arith.constant 0 : index
    %13 = vector.load %arg6[%c0_10, %c0_11] : memref<128x128xf32, #tpu.memory_space<vmem>>, vector<128x128xf32>
    %c0_12 = arith.constant 0 : index
    %c0_13 = arith.constant 0 : index
    %14 = vector.load %arg7[%c0_12, %c0_13] : memref<1x128xf32, #tpu.memory_space<vmem>>, vector<1x128xf32>
    %cst_14 = arith.constant dense<0.000000e+00> : vector<8x128xf32>
    %15 = tpu.matmul %12, %13, %cst_14 {dimension_numbers = #tpu.dot_dimension_numbers<[1], [0], [0], [1], [0, 0, 1, 1], [], []>} : vector<8x128xf32>, vector<128x128xf32>, vector<8x128xf32> -> vector<8x128xf32>
    %16 = vector.broadcast %14 : vector<1x128xf32> to vector<8x128xf32>
    %17 = arith.addf %15, %16 : vector<8x128xf32>
    %18 = math.tanh %17 : vector<8x128xf32>
    %c0_15 = arith.constant 0 : index
    %c0_16 = arith.constant 0 : index
    %19 = vector.load %arg8[%c0_15, %c0_16] : memref<128x128xf32, #tpu.memory_space<vmem>>, vector<128x128xf32>
    %c0_17 = arith.constant 0 : index
    %c0_18 = arith.constant 0 : index
    %20 = vector.load %arg9[%c0_17, %c0_18] : memref<1x128xf32, #tpu.memory_space<vmem>>, vector<1x128xf32>
    %cst_19 = arith.constant dense<0.000000e+00> : vector<8x128xf32>
    %21 = tpu.matmul %18, %19, %cst_19 {dimension_numbers = #tpu.dot_dimension_numbers<[1], [0], [0], [1], [0, 0, 1, 1], [], []>} : vector<8x128xf32>, vector<128x128xf32>, vector<8x128xf32> -> vector<8x128xf32>
    %22 = vector.broadcast %20 : vector<1x128xf32> to vector<8x128xf32>
    %23 = arith.addf %21, %22 : vector<8x128xf32>
    %c0_20 = arith.constant 0 : index
    %c0_21 = arith.constant 0 : index
    %24 = vector.load %arg10[%c0_20, %c0_21] : memref<8x128xf32, #tpu.memory_space<vmem>>, vector<8x128xf32>
    tpu.vector_store %arg10[%c0_20, %c0_21], %23 {strides = array<i32>} : memref<8x128xf32, #tpu.memory_space<vmem>>, vector<8x128xf32>,
    return
  }
  func.func @transform_0(%arg0: i32) -> (i32, i32) {
    %c0_i32 = arith.constant 0 : i32
    %c0_i32_0 = arith.constant 0 : i32
    return %arg0, %c0_i32 : i32, i32
  }
  func.func @transform_1(%arg0: i32) -> (i32, i32) {
    %c0_i32 = arith.constant 0 : i32
    %c0_i32_0 = arith.constant 0 : i32
    %c0_i32_1 = arith.constant 0 : i32
    return %c0_i32, %c0_i32_0 : i32, i32
  }
  func.func @transform_2(%arg0: i32) -> (i32, i32) {
    %c0_i32 = arith.constant 0 : i32
    %c0_i32_0 = arith.constant 0 : i32
    %c0_i32_1 = arith.constant 0 : i32
    return %c0_i32, %c0_i32_0 : i32, i32
  }
  func.func @transform_3(%arg0: i32) -> (i32, i32) {
    %c0_i32 = arith.constant 0 : i32
    %c0_i32_0 = arith.constant 0 : i32
    %c0_i32_1 = arith.constant 0 : i32
    return %c0_i32, %c0_i32_0 : i32, i32
  }
  func.func @transform_4(%arg0: i32) -> (i32, i32) {
    %c0_i32 = arith.constant 0 : i32
    %c0_i32_0 = arith.constant 0 : i32
    %c0_i32_1 = arith.constant 0 : i32
    return %c0_i32, %c0_i32_0 : i32, i32
  }
  func.func @transform_5(%arg0: i32) -> (i32, i32) {
    %c0_i32 = arith.constant 0 : i32
    %c0_i32_0 = arith.constant 0 : i32
    %c0_i32_1 = arith.constant 0 : i32
    return %c0_i32, %c0_i32_0 : i32, i32
  }
  func.func @transform_6(%arg0: i32) -> (i32, i32) {
    %c0_i32 = arith.constant 0 : i32
    %c0_i32_0 = arith.constant 0 : i32
    %c0_i32_1 = arith.constant 0 : i32
    return %c0_i32, %c0_i32_0 : i32, i32
  }
  func.func @transform_7(%arg0: i32) -> (i32, i32) {
    %c0_i32 = arith.constant 0 : i32
    %c0_i32_0 = arith.constant 0 : i32
    %c0_i32_1 = arith.constant 0 : i32
    return %c0_i32, %c0_i32_0 : i32, i32
  }
  func.func @transform_8(%arg0: i32) -> (i32, i32) {
    %c0_i32 = arith.constant 0 : i32
    %c0_i32_0 = arith.constant 0 : i32
    %c0_i32_1 = arith.constant 0 : i32
    return %c0_i32, %c0_i32_0 : i32, i32
  }
  func.func @transform_9(%arg0: i32) -> (i32, i32) {
    %c0_i32 = arith.constant 0 : i32
    %c0_i32_0 = arith.constant 0 : i32
    return %arg0, %c0_i32 : i32, i32
  }
}

</mosaic_0001>

<llo_original>
// kernel: encoder_forward.1
$region0: #{encoder_forward.1}
  #allocation0 [shape = 'u32[]', space=smem, size = 0x4, offset = 0x4, fixed_abs, tag = 'smem constant byte address 0x4 - core index']
  #allocation1 [shape = 'u32[144,128]{1,0:T(1,128)}', space=vmem, size = 0x12000, scoped, tag = 'internal scratch']
  %s0 = inlined_call_operand.vmem [shape: f32[8,1024], index: 0, kind: input, shape index: {}]
  %s1 = inlined_call_operand.vmem [shape: f32[1024,128], index: 1, kind: input, shape index: {}]
  %s2 = inlined_call_operand.vmem [shape: f32[1,128], index: 2, kind: input, shape index: {}]
  %s3 = inlined_call_operand.vmem [shape: f32[128,128], index: 3, kind: input, shape index: {}]
  %s4 = inlined_call_operand.vmem [shape: f32[1,128], index: 4, kind: input, shape index: {}]
  %s5 = inlined_call_operand.vmem [shape: f32[128,128], index: 5, kind: input, shape index: {}]
  %s6 = inlined_call_operand.vmem [shape: f32[1,128], index: 6, kind: input, shape index: {}]
  %s7 = inlined_call_operand.vmem [shape: f32[128,128], index: 7, kind: input, shape index: {}]
  %s8 = inlined_call_operand.vmem [shape: f32[1,128], index: 8, kind: input, shape index: {}]
  %s9 = inlined_call_operand.vmem [shape: f32[8,128], index: 9, kind: output, shape index: {}]
  %s10 = sld [smem:[#allocation0]]
  $region46: #{encoder_forward.1} parent=0
    _
  %s12 = ssub.s32 1, %s10
  %s13 = scalar_select 0, %s12, %s10
  // Predicated region
  $region2: #{encoder_forward.1} parent=0 // pred_check
    _
  $region3: #{encoder_forward.1} parent=0 // pred_check_branch
    %15 = sbr.rel (0) target = $region5
  $region4: #{encoder_forward.1} parent=0 // pred_region
    _
  $region5: #{encoder_forward.1} parent=0 // pred_fallthru
    _
  // Predicated region
  $region6: #{encoder_forward.1} parent=0 // pred_check
    _
  $region7: #{encoder_forward.1} parent=0 // pred_check_branch
    %17 = sbr.rel (0) target = $region9
  $region8: #{encoder_forward.1} parent=0 // pred_region
    _
  $region9: #{encoder_forward.1} parent=0 // pred_fallthru
    _
  // Predicated region
  $region10: #{encoder_forward.1} parent=0 // pred_check
    _
  $region11: #{encoder_forward.1} parent=0 // pred_check_branch
    %19 = sbr.rel (0) target = $region13
  $region12: #{encoder_forward.1} parent=0 // pred_region
    _
  $region13: #{encoder_forward.1} parent=0 // pred_fallthru
    _
  // Predicated region
  $region14: #{encoder_forward.1} parent=0 // pred_check
    _
  $region15: #{encoder_forward.1} parent=0 // pred_check_branch
    %21 = sbr.rel (0) target = $region17
  $region16: #{encoder_forward.1} parent=0 // pred_region
    _
  $region17: #{encoder_forward.1} parent=0 // pred_fallthru
    _
  // Predicated region
  $region18: #{encoder_forward.1} parent=0 // pred_check
    _
  $region19: #{encoder_forward.1} parent=0 // pred_check_branch
    %23 = sbr.rel (0) target = $region21
  $region20: #{encoder_forward.1} parent=0 // pred_region
    _
  $region21: #{encoder_forward.1} parent=0 // pred_fallthru
    _
  // Predicated region
  $region22: #{encoder_forward.1} parent=0 // pred_check
    _
  $region23: #{encoder_forward.1} parent=0 // pred_check_branch
    %25 = sbr.rel (0) target = $region25
  $region24: #{encoder_forward.1} parent=0 // pred_region
    _
  $region25: #{encoder_forward.1} parent=0 // pred_fallthru
    _
  // Predicated region
  $region26: #{encoder_forward.1} parent=0 // pred_check
    _
  $region27: #{encoder_forward.1} parent=0 // pred_check_branch
    %27 = sbr.rel (0) target = $region29
  $region28: #{encoder_forward.1} parent=0 // pred_region
    _
  $region29: #{encoder_forward.1} parent=0 // pred_fallthru
    _
  // Predicated region
  $region30: #{encoder_forward.1} parent=0 // pred_check
    _
  $region31: #{encoder_forward.1} parent=0 // pred_check_branch
    %29 = sbr.rel (0) target = $region33
  $region32: #{encoder_forward.1} parent=0 // pred_region
    _
  $region33: #{encoder_forward.1} parent=0 // pred_fallthru
    _
  // Predicated region
  $region34: #{encoder_forward.1} parent=0 // pred_check
    _
  $region35: #{encoder_forward.1} parent=0 // pred_check_branch
    %31 = sbr.rel (0) target = $region37
  $region36: #{encoder_forward.1} parent=0 // pred_region
    _
  $region37: #{encoder_forward.1} parent=0 // pred_fallthru
    _
  %v32 = vld [vmem:[%s0] sm:$0xff]
  %v33 = vld [vmem:[%s0 + $0x8] sm:$0xff]
  %v34 = vld [vmem:[%s0 + $0x10] sm:$0xff]
  %v35 = vld [vmem:[%s0 + $0x18] sm:$0xff]
  %v36 = vld [vmem:[%s0 + $0x20] sm:$0xff]
  %v37 = vld [vmem:[%s0 + $0x28] sm:$0xff]
  %v38 = vld [vmem:[%s0 + $0x30] sm:$0xff]
  %v39 = vld [vmem:[%s0 + $0x38] sm:$0xff]
  %v40 = vld [vmem:[%s1] sm:$0xff]
  %v41 = vld [vmem:[%s1 + $0x8] sm:$0xff]
  %v42 = vld [vmem:[%s1 + $0x10] sm:$0xff]
  %v43 = vld [vmem:[%s1 + $0x18] sm:$0xff]
  %v44 = vld [vmem:[%s1 + $0x20] sm:$0xff]
  %v45 = vld [vmem:[%s1 + $0x28] sm:$0xff]
  %v46 = vld [vmem:[%s1 + $0x30] sm:$0xff]
  %v47 = vld [vmem:[%s1 + $0x38] sm:$0xff]
  %v48 = vld [vmem:[%s1 + $0x40] sm:$0xff]
  %v49 = vld [vmem:[%s1 + $0x48] sm:$0xff]
  %v50 = vld [vmem:[%s1 + $0x50] sm:$0xff]
  %v51 = vld [vmem:[%s1 + $0x58] sm:$0xff]
  %v52 = vld [vmem:[%s1 + $0x60] sm:$0xff]
  %v53 = vld [vmem:[%s1 + $0x68] sm:$0xff]
  %v54 = vld [vmem:[%s1 + $0x70] sm:$0xff]
  %v55 = vld [vmem:[%s1 + $0x78] sm:$0xff]
  %v56 = vld [vmem:[%s1 + $0x80] sm:$0xff]
  %v57 = vld [vmem:[%s1 + $0x88] sm:$0xff]
  %v58 = vld [vmem:[%s1 + $0x90] sm:$0xff]
  %v59 = vld [vmem:[%s1 + $0x98] sm:$0xff]
  %v60 = vld [vmem:[%s1 + $0xa0] sm:$0xff]
  %v61 = vld [vmem:[%s1 + $0xa8] sm:$0xff]
  %v62 = vld [vmem:[%s1 + $0xb0] sm:$0xff]
  %v63 = vld [vmem:[%s1 + $0xb8] sm:$0xff]
  %v64 = vld [vmem:[%s1 + $0xc0] sm:$0xff]
  %v65 = vld [vmem:[%s1 + $0xc8] sm:$0xff]
  %v66 = vld [vmem:[%s1 + $0xd0] sm:$0xff]
  %v67 = vld [vmem:[%s1 + $0xd8] sm:$0xff]
  %v68 = vld [vmem:[%s1 + $0xe0] sm:$0xff]
  %v69 = vld [vmem:[%s1 + $0xe8] sm:$0xff]
  %v70 = vld [vmem:[%s1 + $0xf0] sm:$0xff]
  %v71 = vld [vmem:[%s1 + $0xf8] sm:$0xff]
  %v72 = vld [vmem:[%s1 + $0x100] sm:$0xff]
  %v73 = vld [vmem:[%s1 + $0x108] sm:$0xff]
  %v74 = vld [vmem:[%s1 + $0x110] sm:$0xff]
  %v75 = vld [vmem:[%s1 + $0x118] sm:$0xff]
  %v76 = vld [vmem:[%s1 + $0x120] sm:$0xff]
  %v77 = vld [vmem:[%s1 + $0x128] sm:$0xff]
  %v78 = vld [vmem:[%s1 + $0x130] sm:$0xff]
  %v79 = vld [vmem:[%s1 + $0x138] sm:$0xff]
  %v80 = vld [vmem:[%s1 + $0x140] sm:$0xff]
  %v81 = vld [vmem:[%s1 + $0x148] sm:$0xff]
  %v82 = vld [vmem:[%s1 + $0x150] sm:$0xff]
  %v83 = vld [vmem:[%s1 + $0x158] sm:$0xff]
  %v84 = vld [vmem:[%s1 + $0x160] sm:$0xff]
  %v85 = vld [vmem:[%s1 + $0x168] sm:$0xff]
  %v86 = vld [vmem:[%s1 + $0x170] sm:$0xff]
  %v87 = vld [vmem:[%s1 + $0x178] sm:$0xff]
  %v88 = vld [vmem:[%s1 + $0x180] sm:$0xff]
  %v89 = vld [vmem:[%s1 + $0x188] sm:$0xff]
  %v90 = vld [vmem:[%s1 + $0x190] sm:$0xff]
  %v91 = vld [vmem:[%s1 + $0x198] sm:$0xff]
  %v92 = vld [vmem:[%s1 + $0x1a0] sm:$0xff]
  %v93 = vld [vmem:[%s1 + $0x1a8] sm:$0xff]
  %v94 = vld [vmem:[%s1 + $0x1b0] sm:$0xff]
  %v95 = vld [vmem:[%s1 + $0x1b8] sm:$0xff]
  %v96 = vld [vmem:[%s1 + $0x1c0] sm:$0xff]
  %v97 = vld [vmem:[%s1 + $0x1c8] sm:$0xff]
  %v98 = vld [vmem:[%s1 + $0x1d0] sm:$0xff]
  %v99 = vld [vmem:[%s1 + $0x1d8] sm:$0xff]
  %v100 = vld [vmem:[%s1 + $0x1e0] sm:$0xff]
  %v101 = vld [vmem:[%s1 + $0x1e8] sm:$0xff]
  %v102 = vld [vmem:[%s1 + $0x1f0] sm:$0xff]
  %v103 = vld [vmem:[%s1 + $0x1f8] sm:$0xff]
  %v104 = vld [vmem:[%s1 + $0x200] sm:$0xff]
  %v105 = vld [vmem:[%s1 + $0x208] sm:$0xff]
  %v106 = vld [vmem:[%s1 + $0x210] sm:$0xff]
  %v107 = vld [vmem:[%s1 + $0x218] sm:$0xff]
  %v108 = vld [vmem:[%s1 + $0x220] sm:$0xff]
  %v109 = vld [vmem:[%s1 + $0x228] sm:$0xff]
  %v110 = vld [vmem:[%s1 + $0x230] sm:$0xff]
  %v111 = vld [vmem:[%s1 + $0x238] sm:$0xff]
  %v112 = vld [vmem:[%s1 + $0x240] sm:$0xff]
  %v113 = vld [vmem:[%s1 + $0x248] sm:$0xff]
  %v114 = vld [vmem:[%s1 + $0x250] sm:$0xff]
  %v115 = vld [vmem:[%s1 + $0x258] sm:$0xff]
  %v116 = vld [vmem:[%s1 + $0x260] sm:$0xff]
  %v117 = vld [vmem:[%s1 + $0x268] sm:$0xff]
  %v118 = vld [vmem:[%s1 + $0x270] sm:$0xff]
  %v119 = vld [vmem:[%s1 + $0x278] sm:$0xff]
  %v120 = vld [vmem:[%s1 + $0x280] sm:$0xff]
  %v121 = vld [vmem:[%s1 + $0x288] sm:$0xff]
  %v122 = vld [vmem:[%s1 + $0x290] sm:$0xff]
  %v123 = vld [vmem:[%s1 + $0x298] sm:$0xff]
  %v124 = vld [vmem:[%s1 + $0x2a0] sm:$0xff]
  %v125 = vld [vmem:[%s1 + $0x2a8] sm:$0xff]
  %v126 = vld [vmem:[%s1 + $0x2b0] sm:$0xff]
  %v127 = vld [vmem:[%s1 + $0x2b8] sm:$0xff]
  %v128 = vld [vmem:[%s1 + $0x2c0] sm:$0xff]
  %v129 = vld [vmem:[%s1 + $0x2c8] sm:$0xff]
  %v130 = vld [vmem:[%s1 + $0x2d0] sm:$0xff]
  %v131 = vld [vmem:[%s1 + $0x2d8] sm:$0xff]
  %v132 = vld [vmem:[%s1 + $0x2e0] sm:$0xff]
  %v133 = vld [vmem:[%s1 + $0x2e8] sm:$0xff]
  %v134 = vld [vmem:[%s1 + $0x2f0] sm:$0xff]
  %v135 = vld [vmem:[%s1 + $0x2f8] sm:$0xff]
  %v136 = vld [vmem:[%s1 + $0x300] sm:$0xff]
  %v137 = vld [vmem:[%s1 + $0x308] sm:$0xff]
  %v138 = vld [vmem:[%s1 + $0x310] sm:$0xff]
  %v139 = vld [vmem:[%s1 + $0x318] sm:$0xff]
  %v140 = vld [vmem:[%s1 + $0x320] sm:$0xff]
  %v141 = vld [vmem:[%s1 + $0x328] sm:$0xff]
  %v142 = vld [vmem:[%s1 + $0x330] sm:$0xff]
  %v143 = vld [vmem:[%s1 + $0x338] sm:$0xff]
  %v144 = vld [vmem:[%s1 + $0x340] sm:$0xff]
  %v145 = vld [vmem:[%s1 + $0x348] sm:$0xff]
  %v146 = vld [vmem:[%s1 + $0x350] sm:$0xff]
  %v147 = vld [vmem:[%s1 + $0x358] sm:$0xff]
  %v148 = vld [vmem:[%s1 + $0x360] sm:$0xff]
  %v149 = vld [vmem:[%s1 + $0x368] sm:$0xff]
  %v150 = vld [vmem:[%s1 + $0x370] sm:$0xff]
  %v151 = vld [vmem:[%s1 + $0x378] sm:$0xff]
  %v152 = vld [vmem:[%s1 + $0x380] sm:$0xff]
  %v153 = vld [vmem:[%s1 + $0x388] sm:$0xff]
  %v154 = vld [vmem:[%s1 + $0x390] sm:$0xff]
  %v155 = vld [vmem:[%s1 + $0x398] sm:$0xff]
  %v156 = vld [vmem:[%s1 + $0x3a0] sm:$0xff]
  %v157 = vld [vmem:[%s1 + $0x3a8] sm:$0xff]
  %v158 = vld [vmem:[%s1 + $0x3b0] sm:$0xff]
  %v159 = vld [vmem:[%s1 + $0x3b8] sm:$0xff]
  %v160 = vld [vmem:[%s1 + $0x3c0] sm:$0xff]
  %v161 = vld [vmem:[%s1 + $0x3c8] sm:$0xff]
  %v162 = vld [vmem:[%s1 + $0x3d0] sm:$0xff]
  %v163 = vld [vmem:[%s1 + $0x3d8] sm:$0xff]
  %v164 = vld [vmem:[%s1 + $0x3e0] sm:$0xff]
  %v165 = vld [vmem:[%s1 + $0x3e8] sm:$0xff]
  %v166 = vld [vmem:[%s1 + $0x3f0] sm:$0xff]
  %v167 = vld [vmem:[%s1 + $0x3f8] sm:$0xff]
  %v168 = vld [vmem:[%s2] sm:$0x1]
  %v170 = vlaneseq
  %v171 = vshrl.u32 %v170, 7
  %v172 = vsub.s32 0, %v171
  %v173 = vrot.slane %v168, %v172
  %175 = vmatprep.subr.mxu0 0.0
  %176 = vmatpush1.msra.mxu0 %v40
  %177 = vmatprep.subr.mxu0 0.0
  %178 = vmatpush1.msra.mxu0 %v41
  %179 = vmatprep.subr.mxu0 0.0
  %180 = vmatpush1.msra.mxu0 %v42
  %181 = vmatprep.subr.mxu0 0.0
  %182 = vmatpush1.msra.mxu0 %v43
  %183 = vmatprep.subr.mxu0 0.0
  %184 = vmatpush1.msra.mxu0 %v44
  %185 = vmatprep.subr.mxu0 0.0
  %186 = vmatpush1.msra.mxu0 %v45
  %187 = vmatprep.subr.mxu0 0.0
  %188 = vmatpush1.msra.mxu0 %v46
  %189 = vmatprep.subr.mxu0 0.0
  %190 = vmatpush1.msra.mxu0 %v47
  %191 = vmatprep.subr.mxu0 0.0
  %192 = vmatpush1.msra.mxu0 %v48
  %193 = vmatprep.subr.mxu0 0.0
  %194 = vmatpush1.msra.mxu0 %v49
  %195 = vmatprep.subr.mxu0 0.0
  %196 = vmatpush1.msra.mxu0 %v50
  %197 = vmatprep.subr.mxu0 0.0
  %198 = vmatpush1.msra.mxu0 %v51
  %199 = vmatprep.subr.mxu0 0.0
  %200 = vmatpush1.msra.mxu0 %v52
  %201 = vmatprep.subr.mxu0 0.0
  %202 = vmatpush1.msra.mxu0 %v53
  %203 = vmatprep.subr.mxu0 0.0
  %204 = vmatpush1.msra.mxu0 %v54
  %205 = vmatprep.subr.mxu0 0.0
  %206 = vmatpush1.msra.mxu0 %v55
  %207 = vmatprep.subr.mxu0 0.0
  %208 = vmatpush1.msra.mxu0 %v56
  %209 = vmatprep.subr.mxu0 0.0
  %210 = vmatpush1.msra.mxu0 %v57
  %211 = vmatprep.subr.mxu0 0.0
  %212 = vmatpush1.msra.mxu0 %v58
  %213 = vmatprep.subr.mxu0 0.0
  %214 = vmatpush1.msra.mxu0 %v59
  %215 = vmatprep.subr.mxu0 0.0
  %216 = vmatpush1.msra.mxu0 %v60
  %217 = vmatprep.subr.mxu0 0.0
  %218 = vmatpush1.msra.mxu0 %v61
  %219 = vmatprep.subr.mxu0 0.0
  %220 = vmatpush1.msra.mxu0 %v62
  %221 = vmatprep.subr.mxu0 0.0
  %222 = vmatpush1.msra.mxu0 %v63
  %223 = vmatprep.subr.mxu0 0.0
  %224 = vmatpush1.msra.mxu0 %v64
  %225 = vmatprep.subr.mxu0 0.0
  %226 = vmatpush1.msra.mxu0 %v65
  %227 = vmatprep.subr.mxu0 0.0
  %228 = vmatpush1.msra.mxu0 %v66
  %229 = vmatprep.subr.mxu0 0.0
  %230 = vmatpush1.msra.mxu0 %v67
  %231 = vmatprep.subr.mxu0 0.0
  %232 = vmatpush1.msra.mxu0 %v68
  %233 = vmatprep.subr.mxu0 0.0
  %234 = vmatpush1.msra.mxu0 %v69
  %235 = vmatprep.subr.mxu0 0.0
  %236 = vmatpush1.msra.mxu0 %v70
  %237 = vmatprep.subr.mxu0 0.0
  %238 = vmatpush1.msra.mxu0 %v71
  %239 = vmatprep.mubr.f32.mxu0 %v33
  %240 = vmatmul.mubr.f32.gmra.mrb[0].mxu0 %v32
  %v241 = vpop.f32.mrb[0].mxu0
  %v242 = vadd.f32 %v173, %v241
  %v243 = vpop.f32.mrb[0].mxu0
  %244 = vdwg.mxu0
  %245 = vmatprep.subr.mxu0 0.0
  %246 = vmatpush1.msra.mxu0 %v72
  %247 = vmatprep.subr.mxu0 0.0
  %248 = vmatpush1.msra.mxu0 %v73
  %249 = vmatprep.subr.mxu0 0.0
  %250 = vmatpush1.msra.mxu0 %v74
  %251 = vmatprep.subr.mxu0 0.0
  %252 = vmatpush1.msra.mxu0 %v75
  %253 = vmatprep.subr.mxu0 0.0
  %254 = vmatpush1.msra.mxu0 %v76
  %255 = vmatprep.subr.mxu0 0.0
  %256 = vmatpush1.msra.mxu0 %v77
  %257 = vmatprep.subr.mxu0 0.0
  %258 = vmatpush1.msra.mxu0 %v78
  %259 = vmatprep.subr.mxu0 0.0
  %260 = vmatpush1.msra.mxu0 %v79
  %261 = vmatprep.subr.mxu0 0.0
  %262 = vmatpush1.msra.mxu0 %v80
  %263 = vmatprep.subr.mxu0 0.0
  %264 = vmatpush1.msra.mxu0 %v81
  %265 = vmatprep.subr.mxu0 0.0
  %266 = vmatpush1.msra.mxu0 %v82
  %267 = vmatprep.subr.mxu0 0.0
  %268 = vmatpush1.msra.mxu0 %v83
  %269 = vmatprep.subr.mxu0 0.0
  %270 = vmatpush1.msra.mxu0 %v84
  %271 = vmatprep.subr.mxu0 0.0
  %272 = vmatpush1.msra.mxu0 %v85
  %273 = vmatprep.subr.mxu0 0.0
  %274 = vmatpush1.msra.mxu0 %v86
  %275 = vmatprep.subr.mxu0 0.0
  %276 = vmatpush1.msra.mxu0 %v87
  %277 = vmatprep.subr.mxu0 0.0
  %278 = vmatpush1.msra.mxu0 %v88
  %279 = vmatprep.subr.mxu0 0.0
  %280 = vmatpush1.msra.mxu0 %v89
  %281 = vmatprep.subr.mxu0 0.0
  %282 = vmatpush1.msra.mxu0 %v90
  %283 = vmatprep.subr.mxu0 0.0
  %284 = vmatpush1.msra.mxu0 %v91
  %285 = vmatprep.subr.mxu0 0.0
  %286 = vmatpush1.msra.mxu0 %v92
  %287 = vmatprep.subr.mxu0 0.0
  %288 = vmatpush1.msra.mxu0 %v93
  %289 = vmatprep.subr.mxu0 0.0
  %290 = vmatpush1.msra.mxu0 %v94
  %291 = vmatprep.subr.mxu0 0.0
  %292 = vmatpush1.msra.mxu0 %v95
  %293 = vmatprep.subr.mxu0 0.0
  %294 = vmatpush1.msra.mxu0 %v96
  %295 = vmatprep.subr.mxu0 0.0
  %296 = vmatpush1.msra.mxu0 %v97
  %297 = vmatprep.subr.mxu0 0.0
  %298 = vmatpush1.msra.mxu0 %v98
  %299 = vmatprep.subr.mxu0 0.0
  %300 = vmatpush1.msra.mxu0 %v99
  %301 = vmatprep.subr.mxu0 0.0
  %302 = vmatpush1.msra.mxu0 %v100
  %303 = vmatprep.subr.mxu0 0.0
  %304 = vmatpush1.msra.mxu0 %v101
  %305 = vmatprep.subr.mxu0 0.0
  %306 = vmatpush1.msra.mxu0 %v102
  %307 = vmatprep.subr.mxu0 0.0
  %308 = vmatpush1.msra.mxu0 %v103
  %309 = vmatprep.mubr.f32.mxu0 %v35
  %310 = vmatmul.mubr.f32.gmra.mrb[0].mxu0 %v34
  %v311 = vpop.f32.mrb[0].mxu0
  %v312 = vadd.f32 %v242, %v311
  %v313 = vpop.f32.mrb[0].mxu0
  %314 = vdwg.mxu0
  %315 = vmatprep.subr.mxu0 0.0
  %316 = vmatpush1.msra.mxu0 %v104
  %317 = vmatprep.subr.mxu0 0.0
  %318 = vmatpush1.msra.mxu0 %v105
  %319 = vmatprep.subr.mxu0 0.0
  %320 = vmatpush1.msra.mxu0 %v106
  %321 = vmatprep.subr.mxu0 0.0
  %322 = vmatpush1.msra.mxu0 %v107
  %323 = vmatprep.subr.mxu0 0.0
  %324 = vmatpush1.msra.mxu0 %v108
  %325 = vmatprep.subr.mxu0 0.0
  %326 = vmatpush1.msra.mxu0 %v109
  %327 = vmatprep.subr.mxu0 0.0
  %328 = vmatpush1.msra.mxu0 %v110
  %329 = vmatprep.subr.mxu0 0.0
  %330 = vmatpush1.msra.mxu0 %v111
  %331 = vmatprep.subr.mxu0 0.0
  %332 = vmatpush1.msra.mxu0 %v112
  %333 = vmatprep.subr.mxu0 0.0
  %334 = vmatpush1.msra.mxu0 %v113
  %335 = vmatprep.subr.mxu0 0.0
  %336 = vmatpush1.msra.mxu0 %v114
  %337 = vmatprep.subr.mxu0 0.0
  %338 = vmatpush1.msra.mxu0 %v115
  %339 = vmatprep.subr.mxu0 0.0
  %340 = vmatpush1.msra.mxu0 %v116
  %341 = vmatprep.subr.mxu0 0.0
  %342 = vmatpush1.msra.mxu0 %v117
  %343 = vmatprep.subr.mxu0 0.0
  %344 = vmatpush1.msra.mxu0 %v118
  %345 = vmatprep.subr.mxu0 0.0
  %346 = vmatpush1.msra.mxu0 %v119
  %347 = vmatprep.subr.mxu0 0.0
  %348 = vmatpush1.msra.mxu0 %v120
  %349 = vmatprep.subr.mxu0 0.0
  %350 = vmatpush1.msra.mxu0 %v121
  %351 = vmatprep.subr.mxu0 0.0
  %352 = vmatpush1.msra.mxu0 %v122
  %353 = vmatprep.subr.mxu0 0.0
  %354 = vmatpush1.msra.mxu0 %v123
  %355 = vmatprep.subr.mxu0 0.0
  %356 = vmatpush1.msra.mxu0 %v124
  %357 = vmatprep.subr.mxu0 0.0
  %358 = vmatpush1.msra.mxu0 %v125
  %359 = vmatprep.subr.mxu0 0.0
  %360 = vmatpush1.msra.mxu0 %v126
  %361 = vmatprep.subr.mxu0 0.0
  %362 = vmatpush1.msra.mxu0 %v127
  %363 = vmatprep.subr.mxu0 0.0
  %364 = vmatpush1.msra.mxu0 %v128
  %365 = vmatprep.subr.mxu0 0.0
  %366 = vmatpush1.msra.mxu0 %v129
  %367 = vmatprep.subr.mxu0 0.0
  %368 = vmatpush1.msra.mxu0 %v130
  %369 = vmatprep.subr.mxu0 0.0
  %370 = vmatpush1.msra.mxu0 %v131
  %371 = vmatprep.subr.mxu0 0.0
  %372 = vmatpush1.msra.mxu0 %v132
  %373 = vmatprep.subr.mxu0 0.0
  %374 = vmatpush1.msra.mxu0 %v133
  %375 = vmatprep.subr.mxu0 0.0
  %376 = vmatpush1.msra.mxu0 %v134
  %377 = vmatprep.subr.mxu0 0.0
  %378 = vmatpush1.msra.mxu0 %v135
  %379 = vmatprep.mubr.f32.mxu0 %v37
  %380 = vmatmul.mubr.f32.gmra.mrb[0].mxu0 %v36
  %v381 = vpop.f32.mrb[0].mxu0
  %v382 = vadd.f32 %v312, %v381
  %v383 = vpop.f32.mrb[0].mxu0
  %384 = vdwg.mxu0
  %385 = vmatprep.subr.mxu0 0.0
  %386 = vmatpush1.msra.mxu0 %v136
  %387 = vmatprep.subr.mxu0 0.0
  %388 = vmatpush1.msra.mxu0 %v137
  %389 = vmatprep.subr.mxu0 0.0
  %390 = vmatpush1.msra.mxu0 %v138
  %391 = vmatprep.subr.mxu0 0.0
  %392 = vmatpush1.msra.mxu0 %v139
  %393 = vmatprep.subr.mxu0 0.0
  %394 = vmatpush1.msra.mxu0 %v140
  %395 = vmatprep.subr.mxu0 0.0
  %396 = vmatpush1.msra.mxu0 %v141
  %397 = vmatprep.subr.mxu0 0.0
  %398 = vmatpush1.msra.mxu0 %v142
  %399 = vmatprep.subr.mxu0 0.0
  %400 = vmatpush1.msra.mxu0 %v143
  %401 = vmatprep.subr.mxu0 0.0
  %402 = vmatpush1.msra.mxu0 %v144
  %403 = vmatprep.subr.mxu0 0.0
  %404 = vmatpush1.msra.mxu0 %v145
  %405 = vmatprep.subr.mxu0 0.0
  %406 = vmatpush1.msra.mxu0 %v146
  %407 = vmatprep.subr.mxu0 0.0
  %408 = vmatpush1.msra.mxu0 %v147
  %409 = vmatprep.subr.mxu0 0.0
  %410 = vmatpush1.msra.mxu0 %v148
  %411 = vmatprep.subr.mxu0 0.0
  %412 = vmatpush1.msra.mxu0 %v149
  %413 = vmatprep.subr.mxu0 0.0
  %414 = vmatpush1.msra.mxu0 %v150
  %415 = vmatprep.subr.mxu0 0.0
  %416 = vmatpush1.msra.mxu0 %v151
  %417 = vmatprep.subr.mxu0 0.0
  %418 = vmatpush1.msra.mxu0 %v152
  %419 = vmatprep.subr.mxu0 0.0
  %420 = vmatpush1.msra.mxu0 %v153
  %421 = vmatprep.subr.mxu0 0.0
  %422 = vmatpush1.msra.mxu0 %v154
  %423 = vmatprep.subr.mxu0 0.0
  %424 = vmatpush1.msra.mxu0 %v155
  %425 = vmatprep.subr.mxu0 0.0
  %426 = vmatpush1.msra.mxu0 %v156
  %427 = vmatprep.subr.mxu0 0.0
  %428 = vmatpush1.msra.mxu0 %v157
  %429 = vmatprep.subr.mxu0 0.0
  %430 = vmatpush1.msra.mxu0 %v158
  %431 = vmatprep.subr.mxu0 0.0
  %432 = vmatpush1.msra.mxu0 %v159
  %433 = vmatprep.subr.mxu0 0.0
  %434 = vmatpush1.msra.mxu0 %v160
  %435 = vmatprep.subr.mxu0 0.0
  %436 = vmatpush1.msra.mxu0 %v161
  %437 = vmatprep.subr.mxu0 0.0
  %438 = vmatpush1.msra.mxu0 %v162
  %439 = vmatprep.subr.mxu0 0.0
  %440 = vmatpush1.msra.mxu0 %v163
  %441 = vmatprep.subr.mxu0 0.0
  %442 = vmatpush1.msra.mxu0 %v164
  %443 = vmatprep.subr.mxu0 0.0
  %444 = vmatpush1.msra.mxu0 %v165
  %445 = vmatprep.subr.mxu0 0.0
  %446 = vmatpush1.msra.mxu0 %v166
  %447 = vmatprep.subr.mxu0 0.0
  %448 = vmatpush1.msra.mxu0 %v167
  %449 = vmatprep.mubr.f32.mxu0 %v39
  %450 = vmatmul.mubr.f32.gmra.mrb[0].mxu0 %v38
  %v451 = vpop.f32.mrb[0].mxu0
  %v452 = vadd.f32 %v382, %v451
  %v453 = vpop.f32.mrb[0].mxu0
  %454 = vdwg.mxu0
  %v455 = vtanh.pop %v452
  %v456 = vld [vmem:[%s3] sm:$0xff]
  %v457 = vld [vmem:[%s3 + $0x8] sm:$0xff]
  %v458 = vld [vmem:[%s3 + $0x10] sm:$0xff]
  %v459 = vld [vmem:[%s3 + $0x18] sm:$0xff]
  %v460 = vld [vmem:[%s3 + $0x20] sm:$0xff]
  %v461 = vld [vmem:[%s3 + $0x28] sm:$0xff]
  %v462 = vld [vmem:[%s3 + $0x30] sm:$0xff]
  %v463 = vld [vmem:[%s3 + $0x38] sm:$0xff]
  %v464 = vld [vmem:[%s3 + $0x40] sm:$0xff]
  %v465 = vld [vmem:[%s3 + $0x48] sm:$0xff]
  %v466 = vld [vmem:[%s3 + $0x50] sm:$0xff]
  %v467 = vld [vmem:[%s3 + $0x58] sm:$0xff]
  %v468 = vld [vmem:[%s3 + $0x60] sm:$0xff]
  %v469 = vld [vmem:[%s3 + $0x68] sm:$0xff]
  %v470 = vld [vmem:[%s3 + $0x70] sm:$0xff]
  %v471 = vld [vmem:[%s3 + $0x78] sm:$0xff]
  %v472 = vld [vmem:[%s4] sm:$0x1]
  %v474 = vlaneseq
  %v475 = vshrl.u32 %v474, 7
  %v476 = vsub.s32 0, %v475
  %v477 = vrot.slane %v472, %v476
  %479 = vmatprep.subr.mxu0 0.0
  %480 = vmatpush1.msra.mxu0 %v456
  %481 = vmatprep.subr.mxu0 0.0
  %482 = vmatpush1.msra.mxu0 %v457
  %483 = vmatprep.subr.mxu0 0.0
  %484 = vmatpush1.msra.mxu0 %v458
  %485 = vmatprep.subr.mxu0 0.0
  %486 = vmatpush1.msra.mxu0 %v459
  %487 = vmatprep.subr.mxu0 0.0
  %488 = vmatpush1.msra.mxu0 %v460
  %489 = vmatprep.subr.mxu0 0.0
  %490 = vmatpush1.msra.mxu0 %v461
  %491 = vmatprep.subr.mxu0 0.0
  %492 = vmatpush1.msra.mxu0 %v462
  %493 = vmatprep.subr.mxu0 0.0
  %494 = vmatpush1.msra.mxu0 %v463
  %495 = vmatprep.subr.mxu0 0.0
  %496 = vmatpush1.msra.mxu0 %v464
  %497 = vmatprep.subr.mxu0 0.0
  %498 = vmatpush1.msra.mxu0 %v465
  %499 = vmatprep.subr.mxu0 0.0
  %500 = vmatpush1.msra.mxu0 %v466
  %501 = vmatprep.subr.mxu0 0.0
  %502 = vmatpush1.msra.mxu0 %v467
  %503 = vmatprep.subr.mxu0 0.0
  %504 = vmatpush1.msra.mxu0 %v468
  %505 = vmatprep.subr.mxu0 0.0
  %506 = vmatpush1.msra.mxu0 %v469
  %507 = vmatprep.subr.mxu0 0.0
  %508 = vmatpush1.msra.mxu0 %v470
  %509 = vmatprep.subr.mxu0 0.0
  %510 = vmatpush1.msra.mxu0 %v471
  %511 = vmatprep.subr.mxu0 0.0
  %512 = vmatpush1.msra.mxu0 0.0
  %513 = vmatprep.subr.mxu0 0.0
  %514 = vmatpush1.msra.mxu0 0.0
  %515 = vmatprep.subr.mxu0 0.0
  %516 = vmatpush1.msra.mxu0 0.0
  %517 = vmatprep.subr.mxu0 0.0
  %518 = vmatpush1.msra.mxu0 0.0
  %519 = vmatprep.subr.mxu0 0.0
  %520 = vmatpush1.msra.mxu0 0.0
  %521 = vmatprep.subr.mxu0 0.0
  %522 = vmatpush1.msra.mxu0 0.0
  %523 = vmatprep.subr.mxu0 0.0
  %524 = vmatpush1.msra.mxu0 0.0
  %525 = vmatprep.subr.mxu0 0.0
  %526 = vmatpush1.msra.mxu0 0.0
  %527 = vmatprep.subr.mxu0 0.0
  %528 = vmatpush1.msra.mxu0 0.0
  %529 = vmatprep.subr.mxu0 0.0
  %530 = vmatpush1.msra.mxu0 0.0
  %531 = vmatprep.subr.mxu0 0.0
  %532 = vmatpush1.msra.mxu0 0.0
  %533 = vmatprep.subr.mxu0 0.0
  %534 = vmatpush1.msra.mxu0 0.0
  %535 = vmatprep.subr.mxu0 0.0
  %536 = vmatpush1.msra.mxu0 0.0
  %537 = vmatprep.subr.mxu0 0.0
  %538 = vmatpush1.msra.mxu0 0.0
  %539 = vmatprep.subr.mxu0 0.0
  %540 = vmatpush1.msra.mxu0 0.0
  %541 = vmatprep.subr.mxu0 0.0
  %542 = vmatpush1.msra.mxu0 0.0
  %543 = vmatprep.mubr.f32.mxu0 0.0
  %544 = vmatmul.mubr.f32.gmra.mrb[0].mxu0 %v455
  %v545 = vpop.f32.mrb[0].mxu0
  %v546 = vadd.f32 %v477, %v545
  %v547 = vpop.f32.mrb[0].mxu0
  %548 = vdwg.mxu0
  %v549 = vtanh.pop %v546
  %v550 = vld [vmem:[%s5] sm:$0xff]
  %v551 = vld [vmem:[%s5 + $0x8] sm:$0xff]
  %v552 = vld [vmem:[%s5 + $0x10] sm:$0xff]
  %v553 = vld [vmem:[%s5 + $0x18] sm:$0xff]
  %v554 = vld [vmem:[%s5 + $0x20] sm:$0xff]
  %v555 = vld [vmem:[%s5 + $0x28] sm:$0xff]
  %v556 = vld [vmem:[%s5 + $0x30] sm:$0xff]
  %v557 = vld [vmem:[%s5 + $0x38] sm:$0xff]
  %v558 = vld [vmem:[%s5 + $0x40] sm:$0xff]
  %v559 = vld [vmem:[%s5 + $0x48] sm:$0xff]
  %v560 = vld [vmem:[%s5 + $0x50] sm:$0xff]
  %v561 = vld [vmem:[%s5 + $0x58] sm:$0xff]
  %v562 = vld [vmem:[%s5 + $0x60] sm:$0xff]
  %v563 = vld [vmem:[%s5 + $0x68] sm:$0xff]
  %v564 = vld [vmem:[%s5 + $0x70] sm:$0xff]
  %v565 = vld [vmem:[%s5 + $0x78] sm:$0xff]
  %v566 = vld [vmem:[%s6] sm:$0x1]
  %v568 = vlaneseq
  %v569 = vshrl.u32 %v568, 7
  %v570 = vsub.s32 0, %v569
  %v571 = vrot.slane %v566, %v570
  %573 = vmatprep.subr.mxu0 0.0
  %574 = vmatpush1.msra.mxu0 %v550
  %575 = vmatprep.subr.mxu0 0.0
  %576 = vmatpush1.msra.mxu0 %v551
  %577 = vmatprep.subr.mxu0 0.0
  %578 = vmatpush1.msra.mxu0 %v552
  %579 = vmatprep.subr.mxu0 0.0
  %580 = vmatpush1.msra.mxu0 %v553
  %581 = vmatprep.subr.mxu0 0.0
  %582 = vmatpush1.msra.mxu0 %v554
  %583 = vmatprep.subr.mxu0 0.0
  %584 = vmatpush1.msra.mxu0 %v555
  %585 = vmatprep.subr.mxu0 0.0
  %586 = vmatpush1.msra.mxu0 %v556
  %587 = vmatprep.subr.mxu0 0.0
  %588 = vmatpush1.msra.mxu0 %v557
  %589 = vmatprep.subr.mxu0 0.0
  %590 = vmatpush1.msra.mxu0 %v558
  %591 = vmatprep.subr.mxu0 0.0
  %592 = vmatpush1.msra.mxu0 %v559
  %593 = vmatprep.subr.mxu0 0.0
  %594 = vmatpush1.msra.mxu0 %v560
  %595 = vmatprep.subr.mxu0 0.0
  %596 = vmatpush1.msra.mxu0 %v561
  %597 = vmatprep.subr.mxu0 0.0
  %598 = vmatpush1.msra.mxu0 %v562
  %599 = vmatprep.subr.mxu0 0.0
  %600 = vmatpush1.msra.mxu0 %v563
  %601 = vmatprep.subr.mxu0 0.0
  %602 = vmatpush1.msra.mxu0 %v564
  %603 = vmatprep.subr.mxu0 0.0
  %604 = vmatpush1.msra.mxu0 %v565
  %605 = vmatprep.subr.mxu0 0.0
  %606 = vmatpush1.msra.mxu0 0.0
  %607 = vmatprep.subr.mxu0 0.0
  %608 = vmatpush1.msra.mxu0 0.0
  %609 = vmatprep.subr.mxu0 0.0
  %610 = vmatpush1.msra.mxu0 0.0
  %611 = vmatprep.subr.mxu0 0.0
  %612 = vmatpush1.msra.mxu0 0.0
  %613 = vmatprep.subr.mxu0 0.0
  %614 = vmatpush1.msra.mxu0 0.0
  %615 = vmatprep.subr.mxu0 0.0
  %616 = vmatpush1.msra.mxu0 0.0
  %617 = vmatprep.subr.mxu0 0.0
  %618 = vmatpush1.msra.mxu0 0.0
  %619 = vmatprep.subr.mxu0 0.0
  %620 = vmatpush1.msra.mxu0 0.0
  %621 = vmatprep.subr.mxu0 0.0
  %622 = vmatpush1.msra.mxu0 0.0
  %623 = vmatprep.subr.mxu0 0.0
  %624 = vmatpush1.msra.mxu0 0.0
  %625 = vmatprep.subr.mxu0 0.0
  %626 = vmatpush1.msra.mxu0 0.0
  %627 = vmatprep.subr.mxu0 0.0
  %628 = vmatpush1.msra.mxu0 0.0
  %629 = vmatprep.subr.mxu0 0.0
  %630 = vmatpush1.msra.mxu0 0.0
  %631 = vmatprep.subr.mxu0 0.0
  %632 = vmatpush1.msra.mxu0 0.0
  %633 = vmatprep.subr.mxu0 0.0
  %634 = vmatpush1.msra.mxu0 0.0
  %635 = vmatprep.subr.mxu0 0.0
  %636 = vmatpush1.msra.mxu0 0.0
  %637 = vmatprep.mubr.f32.mxu0 0.0
  %638 = vmatmul.mubr.f32.gmra.mrb[0].mxu0 %v549
  %v639 = vpop.f32.mrb[0].mxu0
  %v640 = vadd.f32 %v571, %v639
  %v641 = vpop.f32.mrb[0].mxu0
  %642 = vdwg.mxu0
  %v643 = vtanh.pop %v640
  %v644 = vld [vmem:[%s7] sm:$0xff]
  %v645 = vld [vmem:[%s7 + $0x8] sm:$0xff]
  %v646 = vld [vmem:[%s7 + $0x10] sm:$0xff]
  %v647 = vld [vmem:[%s7 + $0x18] sm:$0xff]
  %v648 = vld [vmem:[%s7 + $0x20] sm:$0xff]
  %v649 = vld [vmem:[%s7 + $0x28] sm:$0xff]
  %v650 = vld [vmem:[%s7 + $0x30] sm:$0xff]
  %v651 = vld [vmem:[%s7 + $0x38] sm:$0xff]
  %v652 = vld [vmem:[%s7 + $0x40] sm:$0xff]
  %v653 = vld [vmem:[%s7 + $0x48] sm:$0xff]
  %v654 = vld [vmem:[%s7 + $0x50] sm:$0xff]
  %v655 = vld [vmem:[%s7 + $0x58] sm:$0xff]
  %v656 = vld [vmem:[%s7 + $0x60] sm:$0xff]
  %v657 = vld [vmem:[%s7 + $0x68] sm:$0xff]
  %v658 = vld [vmem:[%s7 + $0x70] sm:$0xff]
  %v659 = vld [vmem:[%s7 + $0x78] sm:$0xff]
  %v660 = vld [vmem:[%s8] sm:$0x1]
  %v662 = vlaneseq
  %v663 = vshrl.u32 %v662, 7
  %v664 = vsub.s32 0, %v663
  %v665 = vrot.slane %v660, %v664
  %667 = vmatprep.subr.mxu0 0.0
  %668 = vmatpush1.msra.mxu0 %v644
  %669 = vmatprep.subr.mxu0 0.0
  %670 = vmatpush1.msra.mxu0 %v645
  %671 = vmatprep.subr.mxu0 0.0
  %672 = vmatpush1.msra.mxu0 %v646
  %673 = vmatprep.subr.mxu0 0.0
  %674 = vmatpush1.msra.mxu0 %v647
  %675 = vmatprep.subr.mxu0 0.0
  %676 = vmatpush1.msra.mxu0 %v648
  %677 = vmatprep.subr.mxu0 0.0
  %678 = vmatpush1.msra.mxu0 %v649
  %679 = vmatprep.subr.mxu0 0.0
  %680 = vmatpush1.msra.mxu0 %v650
  %681 = vmatprep.subr.mxu0 0.0
  %682 = vmatpush1.msra.mxu0 %v651
  %683 = vmatprep.subr.mxu0 0.0
  %684 = vmatpush1.msra.mxu0 %v652
  %685 = vmatprep.subr.mxu0 0.0
  %686 = vmatpush1.msra.mxu0 %v653
  %687 = vmatprep.subr.mxu0 0.0
  %688 = vmatpush1.msra.mxu0 %v654
  %689 = vmatprep.subr.mxu0 0.0
  %690 = vmatpush1.msra.mxu0 %v655
  %691 = vmatprep.subr.mxu0 0.0
  %692 = vmatpush1.msra.mxu0 %v656
  %693 = vmatprep.subr.mxu0 0.0
  %694 = vmatpush1.msra.mxu0 %v657
  %695 = vmatprep.subr.mxu0 0.0
  %696 = vmatpush1.msra.mxu0 %v658
  %697 = vmatprep.subr.mxu0 0.0
  %698 = vmatpush1.msra.mxu0 %v659
  %699 = vmatprep.subr.mxu0 0.0
  %700 = vmatpush1.msra.mxu0 0.0
  %701 = vmatprep.subr.mxu0 0.0
  %702 = vmatpush1.msra.mxu0 0.0
  %703 = vmatprep.subr.mxu0 0.0
  %704 = vmatpush1.msra.mxu0 0.0
  %705 = vmatprep.subr.mxu0 0.0
  %706 = vmatpush1.msra.mxu0 0.0
  %707 = vmatprep.subr.mxu0 0.0
  %708 = vmatpush1.msra.mxu0 0.0
  %709 = vmatprep.subr.mxu0 0.0
  %710 = vmatpush1.msra.mxu0 0.0
  %711 = vmatprep.subr.mxu0 0.0
  %712 = vmatpush1.msra.mxu0 0.0
  %713 = vmatprep.subr.mxu0 0.0
  %714 = vmatpush1.msra.mxu0 0.0
  %715 = vmatprep.subr.mxu0 0.0
  %716 = vmatpush1.msra.mxu0 0.0
  %717 = vmatprep.subr.mxu0 0.0
  %718 = vmatpush1.msra.mxu0 0.0
  %719 = vmatprep.subr.mxu0 0.0
  %720 = vmatpush1.msra.mxu0 0.0
  %721 = vmatprep.subr.mxu0 0.0
  %722 = vmatpush1.msra.mxu0 0.0
  %723 = vmatprep.subr.mxu0 0.0
  %724 = vmatpush1.msra.mxu0 0.0
  %725 = vmatprep.subr.mxu0 0.0
  %726 = vmatpush1.msra.mxu0 0.0
  %727 = vmatprep.subr.mxu0 0.0
  %728 = vmatpush1.msra.mxu0 0.0
  %729 = vmatprep.subr.mxu0 0.0
  %730 = vmatpush1.msra.mxu0 0.0
  %731 = vmatprep.mubr.f32.mxu0 0.0
  %732 = vmatmul.mubr.f32.gmra.mrb[0].mxu0 %v643
  %v733 = vpop.f32.mrb[0].mxu0
  %v734 = vadd.f32 %v665, %v733
  %v735 = vpop.f32.mrb[0].mxu0
  %736 = vdwg.mxu0
  %737 = vst [vmem:[%s9] sm:$0xff] %v734
  // Predicated region
  $region38: #{encoder_forward.1} parent=0 // pred_check
    _
  $region39: #{encoder_forward.1} parent=0 // pred_check_branch
    %739 = sbr.rel (0) target = $region41
  $region40: #{encoder_forward.1} parent=0 // pred_region
    _
  $region41: #{encoder_forward.1} parent=0 // pred_fallthru
    _
  // Predicated region
  $region42: #{encoder_forward.1} parent=0 // pred_check
    _
  $region43: #{encoder_forward.1} parent=0 // pred_check_branch
    %741 = sbr.rel (0) target = $region45
  $region44: #{encoder_forward.1} parent=0 // pred_region
    _
  $region45: #{encoder_forward.1} parent=0 // pred_fallthru
    _

</llo_original>
